<compile_context>
chip_gen: v7x
topology: tpu7x:2x2x1
jax: 0.10.0
libtpu: 0.0.40
codegen_flags: <defaults>
</compile_context>

<pallas_src>
import numpy as np

import jax
import jax.numpy as jnp
from jax.experimental import pallas as pl
from jax.experimental.pallas import tpu as pltpu

COV_DIAG = 0.5  # torch.diag(torch.full((act_dim,), 0.5))


def _round_up(x, m):
    return ((x + m - 1) // m) * m


def base_actor_kernel(obs_ref, act_ref, w_ref, b_ref, mean_ref, logp_ref):
    """One batch tile: mean = obs @ W + b;  logp = N(mean, 0.5*I).log_prob(act)."""
    # forward: mean = main(obs.float()).  obs may be bf16; it is promoted to
    # f32 on the way into the MXU, accumulation is f32.
    mean = jnp.dot(obs_ref[...], w_ref[...],
                   preferred_element_type=jnp.float32) + b_ref[...]
    mean_ref[...] = mean.astype(mean_ref.dtype)

    # evaluate_act: diagonal-Gaussian log-prob (constants fold at trace time).
    k = mean.shape[-1]  # static Python int
    logp_const = jnp.float32(-0.5 * (k * np.log(2.0 * np.pi) + k * np.log(COV_DIAG)))
    diff = act_ref[...].astype(jnp.float32) - mean
    quad = jnp.sum(diff * diff, axis=-1, keepdims=True) * jnp.float32(1.0 / COV_DIAG)
    logp_ref[...] = -0.5 * quad + logp_const


def _choose_tile(b_rows, tb):
    """Sublane-aligned batch tile, balanced across grid steps.

    For large batches force >=2 steps so v7x's dual TensorCores both get work
    (measured near-zero cost on single-TC v5e/v6e); for small batches a single
    step avoids paying the ~0.35us per-step overhead twice.
    """
    steps = pl.cdiv(b_rows, tb)
    if steps < 2 and b_rows >= 2048:
        steps = 2
    tile = _round_up(pl.cdiv(b_rows, steps), 8)
    return tile, pl.cdiv(b_rows, tile)


def base_actor_apply(obs, weight, bias2d, act, *, tb=4096):
    """obs: [B, obs_dim]; weight: [obs_dim, act_dim] (f32); bias2d: [1, act_dim];
    act: [B, act_dim].  Returns (mean [B, act_dim] f32, logp [B] f32, entropy [B] f32)."""
    B, obs_dim = obs.shape
    act_dim = weight.shape[1]

    # Only pad when B is not sublane-aligned (rare); the aligned path has zero
    # extra HBM passes (no jnp.pad, no output slices).  Uneven batch/tile splits
    # are handled by Pallas partial blocks.
    B8 = _round_up(B, 8)
    if B8 != B:
        pad = B8 - B
        obs = jnp.pad(obs, ((0, pad), (0, 0)))
        act = jnp.pad(act, ((0, pad), (0, 0)))

    TB, grid_b = _choose_tile(B8, tb)

    mean, logp = pl.pallas_call(
        base_actor_kernel,
        out_shape=(
            jax.ShapeDtypeStruct((B8, act_dim), jnp.float32),
            jax.ShapeDtypeStruct((B8, 1), jnp.float32),
        ),
        grid_spec=pl.GridSpec(
            grid=(grid_b,),
            in_specs=[
                pl.BlockSpec((TB, obs_dim), lambda i: (i, 0)),        # obs tile (streamed)
                pl.BlockSpec((TB, act_dim), lambda i: (i, 0)),        # act tile (streamed)
                pl.BlockSpec((obs_dim, act_dim), lambda i: (0, 0)),   # weight (VMEM-resident)
                pl.BlockSpec((1, act_dim), lambda i: (0, 0)),         # bias   (VMEM-resident)
            ],
            out_specs=(
                pl.BlockSpec((TB, act_dim), lambda i: (i, 0)),        # mean tile
                pl.BlockSpec((TB, 1), lambda i: (i, 0)),              # logp tile
            ),
        ),
        compiler_params=pltpu.CompilerParams(
            dimension_semantics=("parallel",),          # megacore / dual-TC sharding
            vmem_limit_bytes=32 * 1024 * 1024,          # safe on v7x (64 MiB physical)
        ),
    )(obs, act, weight, bias2d)

    if B8 != B:
        mean = mean[:B]
        logp = logp[:B]
    logp = logp[:, 0]

    # Entropy of N(mean, 0.5*I) is batch-independent -> compile-time constant.
    ent_const = 0.5 * act_dim * (1.0 + np.log(2.0 * np.pi)) + 0.5 * act_dim * np.log(COV_DIAG)
    ent = jnp.full((B,), jnp.float32(ent_const))
    return mean, logp, ent


def orthogonal_init(key, rows, cols):
    """Deterministic orthogonal init (matches nn.init.orthogonal_ semantics)."""
    a = jax.random.normal(key, (max(rows, cols), min(rows, cols)), dtype=jnp.float32)
    q, r = jnp.linalg.qr(a)
    q = q * jnp.sign(jnp.diag(r))[None, :]
    if rows < cols:
        q = q.T
    return q[:rows, :cols]


def reference(obs_f32, weight, bias, act_f32):
    mean = obs_f32 @ weight + bias
    k = mean.shape[-1]
    diff = act_f32 - mean
    quad = jnp.sum(diff * diff, axis=-1) / COV_DIAG
    log_det = k * np.log(COV_DIAG)
    logp = -0.5 * (quad + k * np.log(2.0 * np.pi) + log_det)
    ent = 0.5 * k * (1.0 + np.log(2.0 * np.pi)) + 0.5 * log_det
    return mean, logp, jnp.full((obs_f32.shape[0],), ent, jnp.float32)


if __name__ == "__main__":
    obs_dim, act_dim = 32, 8

    key = jax.random.PRNGKey(0)
    k_w = jax.random.fold_in(key, 1)

    # BaseNet.init_weight: orthogonal weight, zero bias (reshaped once, outside the call).
    weight = orthogonal_init(k_w, obs_dim, act_dim)          # [obs_dim, act_dim], f32
    bias = jnp.zeros((act_dim,), dtype=jnp.float32)
    bias2d = bias.reshape(1, act_dim)

    ok = True
    # (B, tb, dtype): aligned single tile; multi-tile with partial last block
    # (no pad); unaligned B (minimal pad-to-8 path); bf16 inputs.
    cases = [
        (8, 4096, jnp.float32),
        (200, 128, jnp.float32),
        (300, 4096, jnp.float32),
        (200, 128, jnp.bfloat16),
    ]
    for idx, (B, tb, dtype) in enumerate(cases):
        kb_obs, kb_act = jax.random.split(jax.random.fold_in(key, 100 + idx))
        obs = jax.random.normal(kb_obs, (B, obs_dim), dtype=jnp.float32).astype(dtype)
        batch_act = jax.random.normal(kb_act, (B, act_dim), dtype=jnp.float32).astype(dtype)

        mean, logp, ent = base_actor_apply(obs, weight, bias2d, batch_act, tb=tb)
        jax.block_until_ready((mean, logp, ent))

        # Reference consumes the same (possibly bf16-quantized) inputs in f32.
        mean_ref, logp_ref, ent_ref = reference(
            obs.astype(jnp.float32), weight, bias, batch_act.astype(jnp.float32))
        ok &= np.allclose(np.asarray(mean), np.asarray(mean_ref), atol=1e-4)
        ok &= np.allclose(np.asarray(logp), np.asarray(logp_ref), atol=1e-3)
        ok &= np.allclose(np.asarray(ent), np.asarray(ent_ref), atol=1e-5)

    assert ok, "mismatch vs reference"
    print("KERNEL_OK")
</pallas_src>

<mosaic_0001>
module attributes {stable_mosaic.version = 11 : i64} {
  func.func @base_actor_kernel(%arg0: i32, %arg1: memref<8x32xf32, #tpu.memory_space<vmem>>, %arg2: memref<8x8xf32, #tpu.memory_space<vmem>>, %arg3: memref<32x8xf32, #tpu.memory_space<vmem>>, %arg4: memref<1x8xf32, #tpu.memory_space<vmem>>, %arg5: memref<8x8xf32, #tpu.memory_space<vmem>>, %arg6: memref<8x1xf32, #tpu.memory_space<vmem>>) attributes {dimension_semantics = [#tpu.dimension_semantics<parallel>], iteration_bounds = array<i64: 1>, scalar_prefetch = 0 : i64, scratch_operands = 0 : i64, tpu.core_type = #tpu.core_type<tc>, window_params = [{transform_indices = @transform_0, window_bounds = array<i64: 8, 32>}, {transform_indices = @transform_1, window_bounds = array<i64: 8, 8>}, {pipeline_mode = #tpu.pipeline_mode<synchronous>, transform_indices = @transform_2, window_bounds = array<i64: 32, 8>}, {pipeline_mode = #tpu.pipeline_mode<synchronous>, transform_indices = @transform_3, window_bounds = array<i64: 1, 8>}, {transform_indices = @transform_4, window_bounds = array<i64: 8, 8>}, {transform_indices = @transform_5, window_bounds = array<i64: 8, 1>}]} {
    %c0 = arith.constant 0 : index
    %c0_0 = arith.constant 0 : index
    %0 = vector.load %arg1[%c0, %c0_0] : memref<8x32xf32, #tpu.memory_space<vmem>>, vector<8x32xf32>
    %c0_1 = arith.constant 0 : index
    %c0_2 = arith.constant 0 : index
    %1 = vector.load %arg3[%c0_1, %c0_2] : memref<32x8xf32, #tpu.memory_space<vmem>>, vector<32x8xf32>
    %cst = arith.constant dense<0.000000e+00> : vector<8x8xf32>
    %2 = tpu.matmul %0, %1, %cst {dimension_numbers = #tpu.dot_dimension_numbers<[1], [0], [0], [1], [0, 0, 1, 1], [], []>} : vector<8x32xf32>, vector<32x8xf32>, vector<8x8xf32> -> vector<8x8xf32>
    %c0_3 = arith.constant 0 : index
    %c0_4 = arith.constant 0 : index
    %3 = vector.load %arg4[%c0_3, %c0_4] : memref<1x8xf32, #tpu.memory_space<vmem>>, vector<1x8xf32>
    %4 = vector.broadcast %3 : vector<1x8xf32> to vector<8x8xf32>
    %5 = arith.addf %2, %4 : vector<8x8xf32>
    %c0_5 = arith.constant 0 : index
    %c0_6 = arith.constant 0 : index
    %6 = vector.load %arg5[%c0_5, %c0_6] : memref<8x8xf32, #tpu.memory_space<vmem>>, vector<8x8xf32>
    tpu.vector_store %arg5[%c0_5, %c0_6], %5 {strides = array<i32>} : memref<8x8xf32, #tpu.memory_space<vmem>>, vector<8x8xf32>,
    %c0_7 = arith.constant 0 : index
    %c0_8 = arith.constant 0 : index
    %7 = vector.load %arg2[%c0_7, %c0_8] : memref<8x8xf32, #tpu.memory_space<vmem>>, vector<8x8xf32>
    %8 = arith.subf %7, %5 : vector<8x8xf32>
    %9 = arith.mulf %8, %8 : vector<8x8xf32>
    %cst_9 = arith.constant dense<0.000000e+00> : vector<8xf32>
    %10 = vector.multi_reduction <add>, %9, %cst_9 [1] : vector<8x8xf32> to vector<8xf32>
    %11 = vector.shape_cast %10 : vector<8xf32> to vector<8x1xf32>
    %cst_10 = arith.constant 2.000000e+00 : f32
    %12 = vector.broadcast %cst_10 : f32 to vector<8x1xf32>
    %13 = arith.mulf %11, %12 : vector<8x1xf32>
    %cst_11 = arith.constant -5.000000e-01 : f32
    %14 = vector.broadcast %cst_11 : f32 to vector<8x1xf32>
    %15 = arith.mulf %14, %13 : vector<8x1xf32>
    %cst_12 = arith.constant -4.57891941 : f32
    %16 = vector.broadcast %cst_12 : f32 to vector<8x1xf32>
    %17 = arith.addf %15, %16 : vector<8x1xf32>
    %c0_13 = arith.constant 0 : index
    %c0_14 = arith.constant 0 : index
    %18 = vector.load %arg6[%c0_13, %c0_14] : memref<8x1xf32, #tpu.memory_space<vmem>>, vector<8x1xf32>
    tpu.vector_store %arg6[%c0_13, %c0_14], %17 {strides = array<i32>} : memref<8x1xf32, #tpu.memory_space<vmem>>, vector<8x1xf32>,
    return
  }
  func.func @transform_0(%arg0: i32) -> (i32, i32) {
    %c0_i32 = arith.constant 0 : i32
    %c0_i32_0 = arith.constant 0 : i32
    return %arg0, %c0_i32 : i32, i32
  }
  func.func @transform_1(%arg0: i32) -> (i32, i32) {
    %c0_i32 = arith.constant 0 : i32
    %c0_i32_0 = arith.constant 0 : i32
    return %arg0, %c0_i32 : i32, i32
  }
  func.func @transform_2(%arg0: i32) -> (i32, i32) {
    %c0_i32 = arith.constant 0 : i32
    %c0_i32_0 = arith.constant 0 : i32
    %c0_i32_1 = arith.constant 0 : i32
    return %c0_i32, %c0_i32_0 : i32, i32
  }
  func.func @transform_3(%arg0: i32) -> (i32, i32) {
    %c0_i32 = arith.constant 0 : i32
    %c0_i32_0 = arith.constant 0 : i32
    %c0_i32_1 = arith.constant 0 : i32
    return %c0_i32, %c0_i32_0 : i32, i32
  }
  func.func @transform_4(%arg0: i32) -> (i32, i32) {
    %c0_i32 = arith.constant 0 : i32
    %c0_i32_0 = arith.constant 0 : i32
    return %arg0, %c0_i32 : i32, i32
  }
  func.func @transform_5(%arg0: i32) -> (i32, i32) {
    %c0_i32 = arith.constant 0 : i32
    %c0_i32_0 = arith.constant 0 : i32
    return %arg0, %c0_i32 : i32, i32
  }
}

</mosaic_0001>

<llo_original>
// kernel: tpu_custom_call.1
$region0: #{tpu_custom_call.1}
  #allocation0 [shape = 'u32[]', space=smem, size = 0x4, offset = 0x4, fixed_abs, tag = 'smem constant byte address 0x4 - core index']
  #allocation1 [shape = 'u32[144,128]{1,0:T(1,128)}', space=vmem, size = 0x12000, scoped, tag = 'internal scratch']
  %s0 = inlined_call_operand.vmem [shape: f32[8,32], index: 0, kind: input, shape index: {}]
  %s1 = inlined_call_operand.vmem [shape: f32[8,8], index: 1, kind: input, shape index: {}]
  %s2 = inlined_call_operand.vmem [shape: f32[32,8], index: 2, kind: input, shape index: {}]
  %s3 = inlined_call_operand.vmem [shape: f32[1,8], index: 3, kind: input, shape index: {}]
  %s4 = inlined_call_operand.hbm [shape: f32[8,8], index: 4, kind: output, shape index: {0}]
  %s5 = inlined_call_operand.vmem [shape: f32[8,1], index: 5, kind: output, shape index: {1}]
  %6 = xla_tuple %s4, %s5
  %s7 = sld [smem:[#allocation0]]
  $region34: #{tpu_custom_call.1} parent=0
    _
  %s9 = ssub.s32 1, %s7
  %s10 = scalar_select 0, %s9, %s7
  $region1: #{tpu_custom_call.1} parent=0
    #allocation2 [shape = 'u8[4096]{0}', space=vmem, size = 0x1000, scoped, tag = 'output window, operand 0, single buffered']
    #allocation3 [shape = 's32[1]{0}', space=sflag, size = 0x4, scoped, tag = 'scoped memory for tpu_custom_call.1']
    %11 = vsyncpa [#allocation3], 0
    // Predicated region
    $region2: #{tpu_custom_call.1} parent=1 // pred_check
      _
    $region3: #{tpu_custom_call.1} parent=1 // pred_check_branch
      %13 = sbr.rel (0) target = $region5
    $region4: #{tpu_custom_call.1} parent=1 // pred_region
      _
    $region5: #{tpu_custom_call.1} parent=1 // pred_fallthru
      _
    // Predicated region
    $region6: #{tpu_custom_call.1} parent=1 // pred_check
      _
    $region7: #{tpu_custom_call.1} parent=1 // pred_check_branch
      %15 = sbr.rel (0) target = $region9
    $region8: #{tpu_custom_call.1} parent=1 // pred_region
      _
    $region9: #{tpu_custom_call.1} parent=1 // pred_fallthru
      _
    // Predicated region
    $region10: #{tpu_custom_call.1} parent=1 // pred_check
      _
    $region11: #{tpu_custom_call.1} parent=1 // pred_check_branch
      %17 = sbr.rel (0) target = $region13
    $region12: #{tpu_custom_call.1} parent=1 // pred_region
      _
    $region13: #{tpu_custom_call.1} parent=1 // pred_fallthru
      _
    // Predicated region
    $region14: #{tpu_custom_call.1} parent=1 // pred_check
      _
    $region15: #{tpu_custom_call.1} parent=1 // pred_check_branch
      %19 = sbr.rel (0) target = $region17
    $region16: #{tpu_custom_call.1} parent=1 // pred_region
      _
    $region17: #{tpu_custom_call.1} parent=1 // pred_fallthru
      _
    %v20 = vld [vmem:[%s0] sm:$0xff]
    %v21 = vld [vmem:[%s2] sm:$0xff]
    %v22 = vld [vmem:[%s2 + $0x8] sm:$0xff]
    %v23 = vld [vmem:[%s2 + $0x10] sm:$0xff]
    %v24 = vld [vmem:[%s2 + $0x18] sm:$0xff]
    %v25 = vld [vmem:[%s3] sm:$0x1]
    %v27 = vlaneseq
    %v28 = vshrl.u32 %v27, 7
    %v29 = vsub.s32 0, %v28
    %v30 = vrot.slane %v25, %v29
    %vm32 = vcmask 261120
    %v34 = vsel %vm32, %v20, 0
    %36 = vmatprep.subr.mxu0 0.0
    %37 = vmatpush1.msra.mxu0 %v21
    %38 = vmatprep.subr.mxu0 0.0
    %39 = vmatpush1.msra.mxu0 %v22
    %40 = vmatprep.subr.mxu0 0.0
    %41 = vmatpush1.msra.mxu0 %v23
    %42 = vmatprep.subr.mxu0 0.0
    %43 = vmatpush1.msra.mxu0 %v24
    %44 = vmatprep.subr.mxu0 0.0
    %45 = vmatpush1.msra.mxu0 0.0
    %46 = vmatprep.subr.mxu0 0.0
    %47 = vmatpush1.msra.mxu0 0.0
    %48 = vmatprep.subr.mxu0 0.0
    %49 = vmatpush1.msra.mxu0 0.0
    %50 = vmatprep.subr.mxu0 0.0
    %51 = vmatpush1.msra.mxu0 0.0
    %52 = vmatprep.subr.mxu0 0.0
    %53 = vmatpush1.msra.mxu0 0.0
    %54 = vmatprep.subr.mxu0 0.0
    %55 = vmatpush1.msra.mxu0 0.0
    %56 = vmatprep.subr.mxu0 0.0
    %57 = vmatpush1.msra.mxu0 0.0
    %58 = vmatprep.subr.mxu0 0.0
    %59 = vmatpush1.msra.mxu0 0.0
    %60 = vmatprep.subr.mxu0 0.0
    %61 = vmatpush1.msra.mxu0 0.0
    %62 = vmatprep.subr.mxu0 0.0
    %63 = vmatpush1.msra.mxu0 0.0
    %64 = vmatprep.subr.mxu0 0.0
    %65 = vmatpush1.msra.mxu0 0.0
    %66 = vmatprep.subr.mxu0 0.0
    %67 = vmatpush1.msra.mxu0 0.0
    %68 = vmatprep.subr.mxu0 0.0
    %69 = vmatpush1.msra.mxu0 0.0
    %70 = vmatprep.subr.mxu0 0.0
    %71 = vmatpush1.msra.mxu0 0.0
    %72 = vmatprep.subr.mxu0 0.0
    %73 = vmatpush1.msra.mxu0 0.0
    %74 = vmatprep.subr.mxu0 0.0
    %75 = vmatpush1.msra.mxu0 0.0
    %76 = vmatprep.subr.mxu0 0.0
    %77 = vmatpush1.msra.mxu0 0.0
    %78 = vmatprep.subr.mxu0 0.0
    %79 = vmatpush1.msra.mxu0 0.0
    %80 = vmatprep.subr.mxu0 0.0
    %81 = vmatpush1.msra.mxu0 0.0
    %82 = vmatprep.subr.mxu0 0.0
    %83 = vmatpush1.msra.mxu0 0.0
    %84 = vmatprep.subr.mxu0 0.0
    %85 = vmatpush1.msra.mxu0 0.0
    %86 = vmatprep.subr.mxu0 0.0
    %87 = vmatpush1.msra.mxu0 0.0
    %88 = vmatprep.subr.mxu0 0.0
    %89 = vmatpush1.msra.mxu0 0.0
    %90 = vmatprep.subr.mxu0 0.0
    %91 = vmatpush1.msra.mxu0 0.0
    %92 = vmatprep.subr.mxu0 0.0
    %93 = vmatpush1.msra.mxu0 0.0
    %94 = vmatprep.subr.mxu0 0.0
    %95 = vmatpush1.msra.mxu0 0.0
    %96 = vmatprep.subr.mxu0 0.0
    %97 = vmatpush1.msra.mxu0 0.0
    %98 = vmatprep.subr.mxu0 0.0
    %99 = vmatpush1.msra.mxu0 0.0
    %100 = vmatprep.mubr.f32.mxu0 0.0
    %101 = vmatmul.mubr.f32.gmra.mrb[0].mxu0 %v34
    %v102 = vpop.f32.mrb[0].mxu0
    %v103 = vadd.f32 %v30, %v102
    %v104 = vpop.f32.mrb[0].mxu0
    %105 = vdwg.mxu0
    %vm106 = vcmask 64512
    %107 = vst.msk [vmem:[#allocation2] sm:$0xff] %vm106, %v103
    %v108 = vld [vmem:[%s1] sm:$0xff]
    %v109 = vsub.f32 %v108, %v103
    %v110 = vmul.f32 %v109, %v109
    %v111 = vsel %vm106, %v110, 0.0
    %112 = vadd.xlane.f32.xlu0 %v111
    %v113 = vpop.xlane.xlu0 %112
    %v114 = vmul.f32 %v113, 2.0
    %v115 = vmul.f32 %v114, -0.5
    %v116 = vadd.f32 %v115, -4.5789194
    %vm117 = vcmask 7168
    %118 = vst.msk [vmem:[%s5] sm:$0xff] %vm117, %v116
    // Predicated region
    $region18: #{tpu_custom_call.1} parent=1 // pred_check
      _
    $region19: #{tpu_custom_call.1} parent=1 // pred_check_branch
      %120 = sbr.rel (0) target = $region21
    $region20: #{tpu_custom_call.1} parent=1 // pred_region
      %s122 = ssub.s32 128, 128
      %123 = vsyncadd [#allocation3], %s122
      %s125 = sshll.u32 [#allocation2], 4
      %s126 = int_to_ptr.vmem [resolvable:$true] %s125
      %128 = dma.vmem_to_hbm [thread:$0]  %s126, 128, %s4, [#allocation3]
    $region21: #{tpu_custom_call.1} parent=1 // pred_fallthru
      _
    // Predicated region
    $region22: #{tpu_custom_call.1} parent=1 // pred_check
      _
    $region23: #{tpu_custom_call.1} parent=1 // pred_check_branch
      %130 = sbr.rel (0) target = $region25
    $region24: #{tpu_custom_call.1} parent=1 // pred_region
      _
    $region25: #{tpu_custom_call.1} parent=1 // pred_fallthru
      _
    // Predicated region
    $region26: #{tpu_custom_call.1} parent=1 // pred_check
      _
    $region27: #{tpu_custom_call.1} parent=1 // pred_check_branch
      %132 = sbr.rel (0) target = $region29
    $region28: #{tpu_custom_call.1} parent=1 // pred_region
      %133 = dma.done [#allocation3], 128
    $region29: #{tpu_custom_call.1} parent=1 // pred_fallthru
      _
    // Predicated region
    $region30: #{tpu_custom_call.1} parent=1 // pred_check
      _
    $region31: #{tpu_custom_call.1} parent=1 // pred_check_branch
      %135 = sbr.rel (0) target = $region33
    $region32: #{tpu_custom_call.1} parent=1 // pred_region
      _
    $region33: #{tpu_custom_call.1} parent=1 // pred_fallthru
      _
    %136 = vsyncpa [#allocation3], 1

</llo_original>
